<compile_context>
chip_gen: v7x
topology: tpu7x:2x2x1
jax: 0.10.0
libtpu: 0.0.40
codegen_flags: <defaults>
</compile_context>

<pallas_src>
import functools

import jax
import jax.numpy as jnp
from jax.experimental import pallas as pl
from jax.experimental.pallas import tpu as pltpu

LANES = 128            # vreg lane width
MAX_BLOCK_ROWS = 4096  # 4096 * 128 * 4B = 2 MiB per f32 input buffer


def _mse_kernel(g_ref, c_ref, o_ref, acc_ref, *, valid_rows, block_rows,
                inv_n, needs_mask):
    """Accumulate sum((g - c)^2) over row blocks; emit mean on the last step."""
    j = pl.program_id(0)
    nb = pl.num_programs(0)

    @pl.when(j == 0)
    def _init():
        acc_ref[...] = jnp.zeros_like(acc_ref)

    def accumulate(masked):
        d = g_ref[...].astype(jnp.float32) - c_ref[...].astype(jnp.float32)
        if masked:
            # Only the final partial block: OOB rows of a partial Pallas block
            # are not guaranteed zero, so zero them explicitly.
            row_ids = j * block_rows + jax.lax.broadcasted_iota(
                jnp.int32, d.shape, 0)
            d = jnp.where(row_ids < valid_rows, d, 0.0)
        sq = d * d
        if block_rows % 8 == 0:
            # Pure VPU vreg adds: fold (block_rows, 128) -> (8, 128) by summing
            # whole vregs; no cross-sublane movement in the hot loop.
            acc_ref[...] += jnp.sum(
                sq.reshape(block_rows // 8, 8, LANES), axis=0)
        else:
            # Tiny single-block case (rows < 8): plain sublane reduce into row 0.
            acc_ref[0:1, :] += jnp.sum(sq, axis=0, keepdims=True)

    if needs_mask:
        @pl.when(j < nb - 1)
        def _full_blocks():
            accumulate(masked=False)

        @pl.when(j == nb - 1)
        def _ragged_block():
            accumulate(masked=True)
    else:
        accumulate(masked=False)

    @pl.when(j == nb - 1)
    def _finish():
        # One cross-sublane reduce, one cross-lane reduce, scale by 1/N,
        # store the (1, 1) result — no wrapper-side reduction needed.
        lane_sums = jnp.sum(acc_ref[...], axis=0, keepdims=True)   # (1, 128)
        total = jnp.sum(lane_sums, axis=1, keepdims=True)          # (1, 1)
        o_ref[...] = total * inv_n


@jax.jit
def content_loss(gen_feature: jax.Array, content_feature: jax.Array) -> jax.Array:
    """Pallas implementation of F.mse_loss(gen_feature, content_feature)."""
    assert gen_feature.shape == content_feature.shape
    n_elems = gen_feature.size
    inv_n = 1.0 / float(n_elems)

    # Flatten (zero-copy for contiguous arrays); keep native dtype.
    g = gen_feature.reshape(-1)
    c = content_feature.reshape(-1)

    rows = n_elems // LANES
    rem = n_elems - rows * LANES

    # Ragged tail (< 128 elements): tiny wrapper-side sum instead of padding
    # (zero-copy slice; avoids re-materializing both full operands in HBM).
    tail = None
    if rem:
        g_tail = g[rows * LANES:].astype(jnp.float32)
        c_tail = c[rows * LANES:].astype(jnp.float32)
        tail = jnp.sum((g_tail - c_tail) ** 2)

    if rows == 0:
        # Entire input is smaller than one lane row.
        return tail * inv_n

    g2 = g[: rows * LANES].reshape(rows, LANES)
    c2 = c[: rows * LANES].reshape(rows, LANES)

    # Tile sizing: full extent for small inputs, otherwise big aligned tiles.
    block_rows = rows if rows <= MAX_BLOCK_ROWS else MAX_BLOCK_ROWS
    num_blocks = pl.cdiv(rows, block_rows)
    needs_mask = num_blocks * block_rows != rows  # last block is partial

    kernel = functools.partial(
        _mse_kernel,
        valid_rows=rows,
        block_rows=block_rows,
        inv_n=inv_n,
        needs_mask=needs_mask,
    )

    result = pl.pallas_call(
        kernel,
        out_shape=jax.ShapeDtypeStruct((1, 1), jnp.float32),
        grid_spec=pltpu.PrefetchScalarGridSpec(
            num_scalar_prefetch=0,
            grid=(num_blocks,),
            in_specs=[
                pl.BlockSpec((block_rows, LANES), lambda j: (j, 0)),
                pl.BlockSpec((block_rows, LANES), lambda j: (j, 0)),
            ],
            out_specs=pl.BlockSpec((1, 1), lambda j: (0, 0)),
            scratch_shapes=[pltpu.VMEM((8, LANES), jnp.float32)],
        ),
        compiler_params=pltpu.CompilerParams(
            dimension_semantics=("arbitrary",),
            vmem_limit_bytes=32 * 1024 * 1024,
        ),
    )(g2, c2)

    loss = result[0, 0]
    if rem:
        loss = loss + tail * inv_n
    return loss


if __name__ == "__main__":
    key = jax.random.PRNGKey(0)
    k1, k2 = jax.random.split(key)

    # Small NCHW feature maps, consistent with a conv-feature content loss.
    B, C, H, W = 2, 4, 16, 16
    gen_feature = jax.random.normal(k1, (B, C, H, W), dtype=jnp.float32)
    content_feature = jax.random.normal(k2, (B, C, H, W), dtype=jnp.float32)

    loss = content_loss(gen_feature, content_feature)
    jax.block_until_ready(loss)
    ref = jnp.mean((gen_feature - content_feature) ** 2)
    assert jnp.allclose(loss, ref, rtol=1e-5, atol=1e-6), (loss, ref)

    # Multi-block path with a ragged (masked) last block: rows = 4224 > 4096.
    k3, k4 = jax.random.split(k2)
    big_g = jax.random.normal(k3, (4, 16, 128, 66), dtype=jnp.float32)   # 540672 elems
    big_c = jax.random.normal(k4, (4, 16, 128, 66), dtype=jnp.float32)
    loss_big = content_loss(big_g, big_c)
    jax.block_until_ready(loss_big)
    ref_big = jnp.mean((big_g - big_c) ** 2)
    assert jnp.allclose(loss_big, ref_big, rtol=1e-5, atol=1e-6), (loss_big, ref_big)

    # Tail path (numel % 128 != 0), no padded copy.
    k5, k6 = jax.random.split(k4)
    odd_g = jax.random.normal(k5, (2, 8, 37, 33), dtype=jnp.float32)     # 19536 elems
    odd_c = jax.random.normal(k6, (2, 8, 37, 33), dtype=jnp.float32)
    loss_odd = content_loss(odd_g, odd_c)
    jax.block_until_ready(loss_odd)
    ref_odd = jnp.mean((odd_g - odd_c) ** 2)
    assert jnp.allclose(loss_odd, ref_odd, rtol=1e-5, atol=1e-6), (loss_odd, ref_odd)

    # Tiny shape: rows not a multiple of 8 plus a ragged tail.
    k7, k8 = jax.random.split(k6)
    tiny_g = jax.random.normal(k7, (5, 7, 13, 11), dtype=jnp.float32)    # 5005 elems
    tiny_c = jax.random.normal(k8, (5, 7, 13, 11), dtype=jnp.float32)
    loss_tiny = content_loss(tiny_g, tiny_c)
    jax.block_until_ready(loss_tiny)
    ref_tiny = jnp.mean((tiny_g - tiny_c) ** 2)
    assert jnp.allclose(loss_tiny, ref_tiny, rtol=1e-5, atol=1e-6), (loss_tiny, ref_tiny)

    print("KERNEL_OK")
</pallas_src>

<mosaic_0001>
module attributes {stable_mosaic.version = 11 : i64} {
  func.func @_mse_kernel(%arg0: i32, %arg1: memref<16x128xf32, #tpu.memory_space<vmem>>, %arg2: memref<16x128xf32, #tpu.memory_space<vmem>>, %arg3: memref<1x1xf32, #tpu.memory_space<vmem>>, %arg4: memref<8x128xf32, #tpu.memory_space<vmem>>) attributes {dimension_semantics = [#tpu.dimension_semantics<arbitrary>], iteration_bounds = array<i64: 1>, scalar_prefetch = 0 : i64, scratch_operands = 1 : i64, tpu.core_type = #tpu.core_type<tc>, window_params = [{transform_indices = @transform_0, window_bounds = array<i64: 16, 128>}, {transform_indices = @transform_1, window_bounds = array<i64: 16, 128>}, {pipeline_mode = #tpu.pipeline_mode<synchronous>, transform_indices = @transform_2, window_bounds = array<i64: 1, 1>}]} {
    %c0_i32 = arith.constant 0 : i32
    %0 = arith.cmpi eq, %arg0, %c0_i32 : i32
    %1 = arith.extui %0 : i1 to i32
    %c0_i32_0 = arith.constant 0 : i32
    %2 = arith.cmpi ne, %1, %c0_i32_0 : i32
    scf.if %2 {
      %cst_10 = arith.constant 0.000000e+00 : f32
      %15 = vector.broadcast %cst_10 : f32 to vector<8x128xf32>
      %c0_11 = arith.constant 0 : index
      %c0_12 = arith.constant 0 : index
      %16 = vector.load %arg4[%c0_11, %c0_12] : memref<8x128xf32, #tpu.memory_space<vmem>>, vector<8x128xf32>
      tpu.vector_store %arg4[%c0_11, %c0_12], %15 {strides = array<i32>} : memref<8x128xf32, #tpu.memory_space<vmem>>, vector<8x128xf32>,
    } else {
    }
    %c0 = arith.constant 0 : index
    %c0_1 = arith.constant 0 : index
    %3 = vector.load %arg1[%c0, %c0_1] : memref<16x128xf32, #tpu.memory_space<vmem>>, vector<16x128xf32>
    %c0_2 = arith.constant 0 : index
    %c0_3 = arith.constant 0 : index
    %4 = vector.load %arg2[%c0_2, %c0_3] : memref<16x128xf32, #tpu.memory_space<vmem>>, vector<16x128xf32>
    %5 = arith.subf %3, %4 : vector<16x128xf32>
    %6 = arith.mulf %5, %5 : vector<16x128xf32>
    %c0_4 = arith.constant 0 : index
    %c0_5 = arith.constant 0 : index
    %7 = vector.load %arg4[%c0_4, %c0_5] : memref<8x128xf32, #tpu.memory_space<vmem>>, vector<8x128xf32>
    %8 = vector.shape_cast %6 : vector<16x128xf32> to vector<2x8x128xf32>
    %cst = arith.constant dense<0.000000e+00> : vector<8x128xf32>
    %9 = vector.multi_reduction <add>, %8, %cst [0] : vector<2x8x128xf32> to vector<8x128xf32>
    %10 = arith.addf %7, %9 : vector<8x128xf32>
    %c0_6 = arith.constant 0 : index
    %c0_7 = arith.constant 0 : index
    %11 = vector.load %arg4[%c0_6, %c0_7] : memref<8x128xf32, #tpu.memory_space<vmem>>, vector<8x128xf32>
    tpu.vector_store %arg4[%c0_6, %c0_7], %10 {strides = array<i32>} : memref<8x128xf32, #tpu.memory_space<vmem>>, vector<8x128xf32>,
    %c0_i32_8 = arith.constant 0 : i32
    %12 = arith.cmpi eq, %arg0, %c0_i32_8 : i32
    %13 = arith.extui %12 : i1 to i32
    %c0_i32_9 = arith.constant 0 : i32
    %14 = arith.cmpi ne, %13, %c0_i32_9 : i32
    scf.if %14 {
      %c0_10 = arith.constant 0 : index
      %c0_11 = arith.constant 0 : index
      %15 = vector.load %arg4[%c0_10, %c0_11] : memref<8x128xf32, #tpu.memory_space<vmem>>, vector<8x128xf32>
      %cst_12 = arith.constant dense<0.000000e+00> : vector<128xf32>
      %16 = vector.multi_reduction <add>, %15, %cst_12 [0] : vector<8x128xf32> to vector<128xf32>
      %17 = vector.shape_cast %16 : vector<128xf32> to vector<1x128xf32>
      %cst_13 = arith.constant dense<0.000000e+00> : vector<1xf32>
      %18 = vector.multi_reduction <add>, %17, %cst_13 [1] : vector<1x128xf32> to vector<1xf32>
      %19 = vector.shape_cast %18 : vector<1xf32> to vector<1x1xf32>
      %cst_14 = arith.constant 4.8828125E-4 : f32
      %20 = vector.broadcast %cst_14 : f32 to vector<1x1xf32>
      %21 = arith.mulf %19, %20 : vector<1x1xf32>
      %c0_15 = arith.constant 0 : index
      %c0_16 = arith.constant 0 : index
      %22 = vector.load %arg3[%c0_15, %c0_16] : memref<1x1xf32, #tpu.memory_space<vmem>>, vector<1x1xf32>
      tpu.vector_store %arg3[%c0_15, %c0_16], %21 {strides = array<i32>} : memref<1x1xf32, #tpu.memory_space<vmem>>, vector<1x1xf32>,
    } else {
    }
    return
  }
  func.func @transform_0(%arg0: i32) -> (i32, i32) {
    %c0_i32 = arith.constant 0 : i32
    %c0_i32_0 = arith.constant 0 : i32
    return %arg0, %c0_i32 : i32, i32
  }
  func.func @transform_1(%arg0: i32) -> (i32, i32) {
    %c0_i32 = arith.constant 0 : i32
    %c0_i32_0 = arith.constant 0 : i32
    return %arg0, %c0_i32 : i32, i32
  }
  func.func @transform_2(%arg0: i32) -> (i32, i32) {
    %c0_i32 = arith.constant 0 : i32
    %c0_i32_0 = arith.constant 0 : i32
    %c0_i32_1 = arith.constant 0 : i32
    return %c0_i32, %c0_i32_0 : i32, i32
  }
}

</mosaic_0001>

<llo_original>
// kernel: content_loss.1
$region0: #{content_loss.1}
  #allocation0 [shape = 'u32[]', space=smem, size = 0x4, offset = 0x4, fixed_abs, tag = 'smem constant byte address 0x4 - core index']
  #allocation1 [shape = 'u32[144,128]{1,0:T(1,128)}', space=vmem, size = 0x12000, scoped, tag = 'internal scratch']
  #allocation2 [shape = 'f32[8,128]{1,0:T(8,128)}', space=vmem, size = 0x1000, scoped, tag = 'scratch operand']
  %s0 = inlined_call_operand.vmem [shape: f32[16,128], index: 0, kind: input, shape index: {}]
  %s1 = inlined_call_operand.vmem [shape: f32[16,128], index: 1, kind: input, shape index: {}]
  %s2 = inlined_call_operand.hbm [shape: f32[1,1], index: 2, kind: output, shape index: {}]
  %s3 = sld [smem:[#allocation0]]
  $region26: #{content_loss.1} parent=0
    _
  %s5 = ssub.s32 1, %s3
  %s6 = scalar_select 0, %s5, %s3
  $region1: #{content_loss.1} parent=0
    #allocation3 [shape = 'u8[512]{0}', space=vmem, size = 0x400, scoped, tag = 'output window, operand 0, single buffered']
    #allocation4 [shape = 's32[1]{0}', space=sflag, size = 0x4, scoped, tag = 'scoped memory for content_loss.1']
    %7 = vsyncpa [#allocation4], 0
    // Predicated region
    $region2: #{content_loss.1} parent=1 // pred_check
      _
    $region3: #{content_loss.1} parent=1 // pred_check_branch
      %9 = sbr.rel (0) target = $region5
    $region4: #{content_loss.1} parent=1 // pred_region
      _
    $region5: #{content_loss.1} parent=1 // pred_fallthru
      _
    // Predicated region
    $region6: #{content_loss.1} parent=1 // pred_check
      _
    $region7: #{content_loss.1} parent=1 // pred_check_branch
      %11 = sbr.rel (0) target = $region9
    $region8: #{content_loss.1} parent=1 // pred_region
      _
    $region9: #{content_loss.1} parent=1 // pred_fallthru
      _
    %p12 = scmp.eq.s32.totalorder 0, 0
    // Predicated region
    $region10: #{content_loss.1} parent=1 // pred_check
      %p13 = pneg %p12
    $region11: #{content_loss.1} parent=1 // pred_check_branch
      %15 = sbr.rel (%p13) target = $region13
    $region12: #{content_loss.1} parent=1 // pred_region
      %16 = vst [vmem:[#allocation2] sm:$0xff] 0.0
    $region13: #{content_loss.1} parent=1 // pred_fallthru
      _
    %v17 = vld [vmem:[%s0] sm:$0xff]
    %v18 = vld [vmem:[%s0 + $0x8] sm:$0xff]
    %v19 = vld [vmem:[%s1] sm:$0xff]
    %v20 = vld [vmem:[%s1 + $0x8] sm:$0xff]
    %v21 = vsub.f32 %v17, %v19
    %v22 = vsub.f32 %v18, %v20
    %v23 = vmul.f32 %v21, %v21
    %v24 = vmul.f32 %v22, %v22
    %v25 = vld [vmem:[#allocation2] sm:$0xff]
    %v26 = vadd.f32 %v23, %v24
    %v27 = vadd.f32 %v25, %v26
    %28 = vst [vmem:[#allocation2] sm:$0xff] %v27
    // Predicated region
    $region14: #{content_loss.1} parent=1 // pred_check
      %p29 = pneg %p12
    $region15: #{content_loss.1} parent=1 // pred_check_branch
      %31 = sbr.rel (%p29) target = $region17
    $region16: #{content_loss.1} parent=1 // pred_region
      %v32 = vld [vmem:[#allocation2] sm:$0xff]
      %v33 = vrot.slane %v32, 4
      %v34 = vadd.f32 %v32, %v33
      %v35 = vrot.slane %v34, 2
      %v36 = vadd.f32 %v34, %v35
      %v37 = vrot.slane %v36, 1
      %v38 = vadd.f32 %v36, %v37
      %39 = vadd.xlane.f32.xlu0 %v38
      %v40 = vpop.xlane.xlu0 %39
      %v41 = vmul.f32 %v40, 0.00048828125
      %vm42 = vcmask 0
      %43 = vst.msk [vmem:[#allocation3] sm:$0x1] %vm42, %v41
    $region17: #{content_loss.1} parent=1 // pred_fallthru
      _
    // Predicated region
    $region18: #{content_loss.1} parent=1 // pred_check
      _
    $region19: #{content_loss.1} parent=1 // pred_check_branch
      %45 = sbr.rel (0) target = $region21
    $region20: #{content_loss.1} parent=1 // pred_region
      %s47 = ssub.s32 16, 16
      %48 = vsyncadd [#allocation4], %s47
      %s50 = sshll.u32 [#allocation3], 4
      %s51 = int_to_ptr.vmem [resolvable:$true] %s50
      %53 = dma.vmem_to_hbm [thread:$0]  %s51, 16, %s2, [#allocation4]
    $region21: #{content_loss.1} parent=1 // pred_fallthru
      _
    // Predicated region
    $region22: #{content_loss.1} parent=1 // pred_check
      _
    $region23: #{content_loss.1} parent=1 // pred_check_branch
      %55 = sbr.rel (0) target = $region25
    $region24: #{content_loss.1} parent=1 // pred_region
      %56 = dma.done [#allocation4], 16
    $region25: #{content_loss.1} parent=1 // pred_fallthru
      _
    %57 = vsyncpa [#allocation4], 1

</llo_original>
